<compile_context>
chip_gen: v7x
topology: tpu7x:2x2x1
jax: 0.10.0
libtpu: 0.0.40
codegen_flags: <defaults>
</compile_context>

<pallas_src>
import functools

import jax
import jax.numpy as jnp
from jax import lax
from jax.experimental import pallas as pl
from jax.experimental.pallas import tpu as pltpu

LANES = 128  # lane-padded fused head width: [actor logits | critic value | zeros]

# Output slab row assignments (transposed (8, B) layout).
_ROW_VALUE, _ROW_LOGP, _ROW_ACTION = 0, 1, 2


def _policy_act_kernel(feat_ref, w_ref, b_ref, out_ref, *, dim_actions):
    feats = feat_ref[...]                                    # (TB, H) native dtype
    w = w_ref[...]                                           # (LANES, H)

    # One fused MXU pass, produced directly in the transposed orientation:
    #   fused_t[l, t] = sum_h w[l, h] * feats[t, h]          -> (LANES, TB)
    fused_t = lax.dot_general(
        w, feats, (((1,), (1,)), ((), ())),
        preferred_element_type=jnp.float32)
    fused_t = fused_t + b_ref[...]                           # (LANES, 1) lane-broadcast

    row = lax.broadcasted_iota(jnp.int32, fused_t.shape, 0)  # class index per sublane
    is_logit = row < dim_actions

    # Mask the critic row and zero padding out of the softmax / argmax.
    logits = jnp.where(is_logit, fused_t, jnp.float32(-1e30))

    max_l = jnp.max(logits, axis=0, keepdims=True)           # (1, TB)
    lse = jnp.log(jnp.sum(jnp.exp(logits - max_l), axis=0, keepdims=True))

    # Deterministic mode(): first argmax. Its shifted logit is exactly 0, so
    # log_prob(action) = -lse with no per-row gather.
    rowf = row.astype(jnp.float32)
    is_max = jnp.logical_and(logits == max_l, is_logit)
    action_f = jnp.min(jnp.where(is_max, rowf, jnp.float32(LANES)),
                       axis=0, keepdims=True)                # (1, TB), exact ints < 128
    logp = -lse                                              # (1, TB)
    # TODO(synk): sampling path needs a real gather of the sampled logit here.

    # Critic value lives in fused row `dim_actions`.
    value = jnp.sum(jnp.where(row == dim_actions, fused_t, 0.0),
                    axis=0, keepdims=True)                   # (1, TB)

    # Pack into the transposed, lane-dense (8, TB) output slab.
    srow = lax.broadcasted_iota(jnp.int32, out_ref.shape, 0)
    out_ref[...] = jnp.where(
        srow == _ROW_VALUE, value,
        jnp.where(srow == _ROW_LOGP, logp,
                  jnp.where(srow == _ROW_ACTION, action_f, 0.0)))


def fuse_policy_head_params(wa, ba, wc, bc, compute_dtype=jnp.float32):
    """One-time fusion of the CategoricalNet + CriticHead linears.

    wa: (A, H), ba: (A,)  -- actor linear, torch (out, in) layout
    wc: (1, H), bc: (1,)  -- critic linear
    Returns (w_fused (128, H) compute_dtype, b_fused (128, 1) f32).
    Call once at init; `policy_act` is the per-step hot path.
    """
    A, H = wa.shape
    assert A + 1 <= LANES, "dim_actions + value row must fit in 128 lanes"
    w = jnp.zeros((LANES, H), jnp.float32)
    w = w.at[:A, :].set(wa.astype(jnp.float32))
    w = w.at[A, :].set(wc.reshape(-1).astype(jnp.float32))
    b = jnp.zeros((LANES, 1), jnp.float32)
    b = b.at[:A, 0].set(ba.reshape(-1).astype(jnp.float32))
    b = b.at[A, 0].set(bc.reshape(-1)[0].astype(jnp.float32))
    return w.astype(compute_dtype), b


def _choose_block_b(B, H, feat_bytes, vmem_budget=12 * 1024 * 1024):
    # Budget against v5e's 16 MiB default scoped VMEM (v6e/v7x have >= that).
    resident = 2 * LANES * H * feat_bytes + 2 * LANES * 4        # fused weight + bias
    per_row = 2 * H * feat_bytes + 2 * 8 * 4 + 4 * LANES * 4     # feats + out + temps
    cap = max(8, (vmem_budget - resident) // per_row)
    if B <= min(cap, 1024):
        return B                                   # one tile covering the whole batch
    return int(min(1024, max(128, (cap // 128) * 128)))


def policy_act(features, w_fused, b_fused, dim_actions, *, block_b=None):
    """Deterministic `act()` head.

    features: (B, H)                           -- output of self.net(...)
    w_fused: (128, H), b_fused: (128, 1)       -- from fuse_policy_head_params
    Returns (value (B,1) f32, action (B,1) i32, action_log_probs (B,1) f32).
    """
    B, H = features.shape
    features = features.astype(w_fused.dtype)    # bf16 path halves the feature read
    feat_bytes = jnp.dtype(w_fused.dtype).itemsize

    if block_b is None:
        block_b = _choose_block_b(B, H, feat_bytes)
    block_b = min(block_b, B)
    if block_b < B:
        # Multi-tile path: keep the transposed output store lane-dense (x128);
        # also a multiple of 16, so bf16 feature loads stay full-rate.
        block_b = max(128, (block_b // 128) * 128)
        if block_b >= B:
            block_b = B
    grid = (pl.cdiv(B, block_b),)                # ragged tail handled by Pallas

    est_vmem = (2 * block_b * H * feat_bytes     # feature tiles (double-buffered)
                + 2 * 8 * block_b * 4            # output tiles
                + 2 * LANES * H * feat_bytes     # fused weight
                + 2 * LANES * 4                  # fused bias
                + 4 * LANES * block_b * 4)       # in-kernel f32 intermediates
    cp_kwargs = dict(dimension_semantics=("parallel",))
    # TODO(synk): use pltpu.CORE_PARALLEL on v7x when grid[0] >= 2.
    if est_vmem > 14 * 1024 * 1024:
        cp_kwargs["vmem_limit_bytes"] = int(min(est_vmem * 3 // 2, 64 * 1024 * 1024))

    kernel = functools.partial(_policy_act_kernel, dim_actions=dim_actions)
    out = pl.pallas_call(
        kernel,
        out_shape=jax.ShapeDtypeStruct((8, B), jnp.float32),
        grid=grid,
        in_specs=[
            pl.BlockSpec((block_b, H), lambda i: (i, 0)),   # features: tiled over B
            pl.BlockSpec((LANES, H), lambda i: (0, 0)),     # fused weight: resident
            pl.BlockSpec((LANES, 1), lambda i: (0, 0)),     # fused bias:   resident
        ],
        out_specs=pl.BlockSpec((8, block_b), lambda i: (0, i)),
        compiler_params=pltpu.CompilerParams(**cp_kwargs),
    )(features, w_fused, b_fused)

    value = out[_ROW_VALUE, :].reshape(B, 1)
    logp = out[_ROW_LOGP, :].reshape(B, 1)
    # torch returns int64 actions; int32 is TPU-native and exact here (A < 128).
    action = out[_ROW_ACTION, :].astype(jnp.int32).reshape(B, 1)
    return value, action, logp


# ---------------- deterministic parameter init (matches nn.init) ----------------
def _orthogonal(key, rows, cols, gain=1.0):
    # nn.init.orthogonal_: QR of a gaussian (transposed if rows < cols)
    flat = jax.random.normal(key, (max(rows, cols), min(rows, cols)), jnp.float32)
    q, r = jnp.linalg.qr(flat)
    q = q * jnp.sign(jnp.diag(r))
    if rows < cols:
        q = q.T
    return gain * q[:rows, :cols]


if __name__ == "__main__":
    master_key = jax.random.PRNGKey(0)

    def run_case(B, H, A, *, compute_dtype=jnp.float32, block_b=None,
                 atol=1e-4, check_action=True):
        kf, kwa, kwc = jax.random.split(jax.random.fold_in(master_key, B * 1000 + H), 3)

        # "features" standing in for self.net(...) output
        features = jax.random.normal(kf, (B, H), jnp.float32)
        # CategoricalNet linear: orthogonal(gain=0.01), bias 0 (habitat convention)
        wa = _orthogonal(kwa, A, H, gain=0.01)
        ba = jnp.zeros((A,), jnp.float32)
        # CriticHead: orthogonal(gain=1), bias 0
        wc = _orthogonal(kwc, 1, H, gain=1.0)
        bc = jnp.zeros((1,), jnp.float32)

        # one-time fusion (init), then the per-step kernel call
        w_fused, b_fused = fuse_policy_head_params(wa, ba, wc, bc, compute_dtype)
        value, action, logp = policy_act(features, w_fused, b_fused, A,
                                         block_b=block_b)
        jax.block_until_ready((value, action, logp))

        # plain-JAX reference
        logits_ref = features @ wa.T + ba
        value_ref = features @ wc.T + bc
        act_ref = jnp.argmax(logits_ref, axis=-1, keepdims=True).astype(jnp.int32)
        lsm = jax.nn.log_softmax(logits_ref, axis=-1)
        logp_ref = jnp.take_along_axis(lsm, act_ref, axis=-1)

        assert value.shape == (B, 1) and action.shape == (B, 1) and logp.shape == (B, 1)
        assert jnp.allclose(value, value_ref, atol=atol), "value mismatch"
        assert jnp.allclose(logp, logp_ref, atol=atol), "log_prob mismatch"
        if check_action:
            assert jnp.all(action == act_ref), "action mismatch"

    # small single-tile case (module-scale per-step act())
    run_case(B=8, H=32, A=4, atol=1e-5)
    # multi-tile case with a ragged tail (forced 128-row blocks, grid of 3)
    run_case(B=300, H=64, A=6, block_b=128, atol=1e-4)
    # bf16 compute-path smoke test (looser tolerance; argmax ties may flip)
    run_case(B=8, H=32, A=4, compute_dtype=jnp.bfloat16, atol=5e-2,
             check_action=False)

    print("KERNEL_OK")
</pallas_src>

<mosaic_0001>
module attributes {stable_mosaic.version = 11 : i64} {
  func.func @_policy_act_kernel(%arg0: i32, %arg1: memref<8x32xf32, #tpu.memory_space<vmem>>, %arg2: memref<128x32xf32, #tpu.memory_space<vmem>>, %arg3: memref<128x1xf32, #tpu.memory_space<vmem>>, %arg4: memref<8x8xf32, #tpu.memory_space<vmem>>) attributes {dimension_semantics = [#tpu.dimension_semantics<parallel>], iteration_bounds = array<i64: 1>, scalar_prefetch = 0 : i64, scratch_operands = 0 : i64, tpu.core_type = #tpu.core_type<tc>, window_params = [{transform_indices = @transform_0, window_bounds = array<i64: 8, 32>}, {pipeline_mode = #tpu.pipeline_mode<synchronous>, transform_indices = @transform_1, window_bounds = array<i64: 128, 32>}, {pipeline_mode = #tpu.pipeline_mode<synchronous>, transform_indices = @transform_2, window_bounds = array<i64: 128, 1>}, {transform_indices = @transform_3, window_bounds = array<i64: 8, 8>}]} {
    %c0 = arith.constant 0 : index
    %c0_0 = arith.constant 0 : index
    %0 = vector.load %arg1[%c0, %c0_0] : memref<8x32xf32, #tpu.memory_space<vmem>>, vector<8x32xf32>
    %c0_1 = arith.constant 0 : index
    %c0_2 = arith.constant 0 : index
    %1 = vector.load %arg2[%c0_1, %c0_2] : memref<128x32xf32, #tpu.memory_space<vmem>>, vector<128x32xf32>
    %cst = arith.constant dense<0.000000e+00> : vector<128x8xf32>
    %2 = tpu.matmul %1, %0, %cst {dimension_numbers = #tpu.dot_dimension_numbers<[1], [1], [0], [0], [0, 0, 1, 0], [], []>} : vector<128x32xf32>, vector<8x32xf32>, vector<128x8xf32> -> vector<128x8xf32>
    %c0_3 = arith.constant 0 : index
    %c0_4 = arith.constant 0 : index
    %3 = vector.load %arg3[%c0_3, %c0_4] : memref<128x1xf32, #tpu.memory_space<vmem>>, vector<128x1xf32>
    %4 = vector.broadcast %3 : vector<128x1xf32> to vector<128x8xf32>
    %5 = arith.addf %2, %4 : vector<128x8xf32>
    %6 = tpu.iota {dimensions = array<i32: 0>} : vector<128x8xi32>
    %c4_i32 = arith.constant 4 : i32
    %7 = vector.broadcast %c4_i32 : i32 to vector<128x8xi32>
    %8 = arith.cmpi slt, %6, %7 : vector<128x8xi32>
    %cst_5 = arith.constant -1.000000e+30 : f32
    %9 = vector.broadcast %cst_5 : f32 to vector<128x8xf32>
    %10 = arith.select %8, %5, %9 : vector<128x8xi1>, vector<128x8xf32>
    %cst_6 = arith.constant dense<0xFF800000> : vector<8xf32>
    %11 = vector.multi_reduction <maximumf>, %10, %cst_6 [0] : vector<128x8xf32> to vector<8xf32>
    %12 = vector.shape_cast %11 : vector<8xf32> to vector<1x8xf32>
    %13 = vector.broadcast %12 : vector<1x8xf32> to vector<128x8xf32>
    %14 = arith.subf %10, %13 : vector<128x8xf32>
    %15 = math.exp %14 : vector<128x8xf32>
    %cst_7 = arith.constant dense<0.000000e+00> : vector<8xf32>
    %16 = vector.multi_reduction <add>, %15, %cst_7 [0] : vector<128x8xf32> to vector<8xf32>
    %17 = vector.shape_cast %16 : vector<8xf32> to vector<1x8xf32>
    %18 = math.log %17 : vector<1x8xf32>
    %19 = arith.sitofp %6 : vector<128x8xi32> to vector<128x8xf32>
    %20 = vector.broadcast %12 : vector<1x8xf32> to vector<128x8xf32>
    %21 = arith.cmpf oeq, %10, %20 : vector<128x8xf32>
    %22 = arith.andi %21, %8 : vector<128x8xi1>
    %cst_8 = arith.constant 1.280000e+02 : f32
    %23 = vector.broadcast %cst_8 : f32 to vector<128x8xf32>
    %24 = arith.select %22, %19, %23 : vector<128x8xi1>, vector<128x8xf32>
    %cst_9 = arith.constant dense<0x7F800000> : vector<8xf32>
    %25 = vector.multi_reduction <minimumf>, %24, %cst_9 [0] : vector<128x8xf32> to vector<8xf32>
    %26 = vector.shape_cast %25 : vector<8xf32> to vector<1x8xf32>
    %cst_10 = arith.constant 0.000000e+00 : f32
    %27 = vector.broadcast %cst_10 : f32 to vector<1x8xf32>
    %28 = arith.subf %27, %18 : vector<1x8xf32>
    %c4_i32_11 = arith.constant 4 : i32
    %29 = vector.broadcast %c4_i32_11 : i32 to vector<128x8xi32>
    %30 = arith.cmpi eq, %6, %29 : vector<128x8xi32>
    %cst_12 = arith.constant 0.000000e+00 : f32
    %31 = vector.broadcast %cst_12 : f32 to vector<128x8xf32>
    %32 = arith.select %30, %5, %31 : vector<128x8xi1>, vector<128x8xf32>
    %cst_13 = arith.constant dense<0.000000e+00> : vector<8xf32>
    %33 = vector.multi_reduction <add>, %32, %cst_13 [0] : vector<128x8xf32> to vector<8xf32>
    %34 = vector.shape_cast %33 : vector<8xf32> to vector<1x8xf32>
    %35 = tpu.iota {dimensions = array<i32: 0>} : vector<8x8xi32>
    %c0_i32 = arith.constant 0 : i32
    %36 = vector.broadcast %c0_i32 : i32 to vector<8x8xi32>
    %37 = arith.cmpi eq, %35, %36 : vector<8x8xi32>
    %c1_i32 = arith.constant 1 : i32
    %38 = vector.broadcast %c1_i32 : i32 to vector<8x8xi32>
    %39 = arith.cmpi eq, %35, %38 : vector<8x8xi32>
    %c2_i32 = arith.constant 2 : i32
    %40 = vector.broadcast %c2_i32 : i32 to vector<8x8xi32>
    %41 = arith.cmpi eq, %35, %40 : vector<8x8xi32>
    %cst_14 = arith.constant 0.000000e+00 : f32
    %42 = vector.shape_cast %26 : vector<1x8xf32> to vector<1x8xf32>
    %43 = vector.broadcast %42 : vector<1x8xf32> to vector<8x8xf32>
    %44 = vector.broadcast %cst_14 : f32 to vector<8x8xf32>
    %45 = arith.select %41, %43, %44 : vector<8x8xi1>, vector<8x8xf32>
    %46 = vector.shape_cast %28 : vector<1x8xf32> to vector<1x8xf32>
    %47 = vector.broadcast %46 : vector<1x8xf32> to vector<8x8xf32>
    %48 = arith.select %39, %47, %45 : vector<8x8xi1>, vector<8x8xf32>
    %49 = vector.shape_cast %34 : vector<1x8xf32> to vector<1x8xf32>
    %50 = vector.broadcast %49 : vector<1x8xf32> to vector<8x8xf32>
    %51 = arith.select %37, %50, %48 : vector<8x8xi1>, vector<8x8xf32>
    %c0_15 = arith.constant 0 : index
    %c0_16 = arith.constant 0 : index
    %52 = vector.load %arg4[%c0_15, %c0_16] : memref<8x8xf32, #tpu.memory_space<vmem>>, vector<8x8xf32>
    tpu.vector_store %arg4[%c0_15, %c0_16], %51 {strides = array<i32>} : memref<8x8xf32, #tpu.memory_space<vmem>>, vector<8x8xf32>,
    return
  }
  func.func @transform_0(%arg0: i32) -> (i32, i32) {
    %c0_i32 = arith.constant 0 : i32
    %c0_i32_0 = arith.constant 0 : i32
    return %arg0, %c0_i32 : i32, i32
  }
  func.func @transform_1(%arg0: i32) -> (i32, i32) {
    %c0_i32 = arith.constant 0 : i32
    %c0_i32_0 = arith.constant 0 : i32
    %c0_i32_1 = arith.constant 0 : i32
    return %c0_i32, %c0_i32_0 : i32, i32
  }
  func.func @transform_2(%arg0: i32) -> (i32, i32) {
    %c0_i32 = arith.constant 0 : i32
    %c0_i32_0 = arith.constant 0 : i32
    %c0_i32_1 = arith.constant 0 : i32
    return %c0_i32, %c0_i32_0 : i32, i32
  }
  func.func @transform_3(%arg0: i32) -> (i32, i32) {
    %c0_i32 = arith.constant 0 : i32
    %c0_i32_0 = arith.constant 0 : i32
    return %c0_i32, %arg0 : i32, i32
  }
}

</mosaic_0001>

<llo_original>
// kernel: tpu_custom_call.1
$region0: #{tpu_custom_call.1}
  #allocation0 [shape = 'u32[]', space=smem, size = 0x4, offset = 0x4, fixed_abs, tag = 'smem constant byte address 0x4 - core index']
  #allocation1 [shape = 'u32[144,128]{1,0:T(1,128)}', space=vmem, size = 0x12000, scoped, tag = 'internal scratch']
  %s0 = inlined_call_operand.vmem [shape: f32[8,32], index: 0, kind: input, shape index: {}]
  %s1 = inlined_call_operand.vmem [shape: f32[128,32], index: 1, kind: input, shape index: {}]
  %s2 = inlined_call_operand.vmem [shape: f32[128,1], index: 2, kind: input, shape index: {}]
  %s3 = inlined_call_operand.hbm [shape: f32[8,8], index: 3, kind: output, shape index: {}]
  %s4 = sld [smem:[#allocation0]]
  $region22: #{tpu_custom_call.1} parent=0
    _
  %s6 = ssub.s32 1, %s4
  %s7 = scalar_select 0, %s6, %s4
  $region1: #{tpu_custom_call.1} parent=0
    #allocation2 [shape = 'u8[4096]{0}', space=vmem, size = 0x1000, scoped, tag = 'output window, operand 0, single buffered']
    #allocation3 [shape = 's32[1]{0}', space=sflag, size = 0x4, scoped, tag = 'scoped memory for tpu_custom_call.1']
    %8 = vsyncpa [#allocation3], 0
    // Predicated region
    $region2: #{tpu_custom_call.1} parent=1 // pred_check
      _
    $region3: #{tpu_custom_call.1} parent=1 // pred_check_branch
      %10 = sbr.rel (0) target = $region5
    $region4: #{tpu_custom_call.1} parent=1 // pred_region
      _
    $region5: #{tpu_custom_call.1} parent=1 // pred_fallthru
      _
    // Predicated region
    $region6: #{tpu_custom_call.1} parent=1 // pred_check
      _
    $region7: #{tpu_custom_call.1} parent=1 // pred_check_branch
      %12 = sbr.rel (0) target = $region9
    $region8: #{tpu_custom_call.1} parent=1 // pred_region
      _
    $region9: #{tpu_custom_call.1} parent=1 // pred_fallthru
      _
    // Predicated region
    $region10: #{tpu_custom_call.1} parent=1 // pred_check
      _
    $region11: #{tpu_custom_call.1} parent=1 // pred_check_branch
      %14 = sbr.rel (0) target = $region13
    $region12: #{tpu_custom_call.1} parent=1 // pred_region
      _
    $region13: #{tpu_custom_call.1} parent=1 // pred_fallthru
      _
    %v15 = vld [vmem:[%s0] sm:$0xff]
    %v16 = vld [vmem:[%s1] sm:$0xff]
    %v17 = vld [vmem:[%s1 + $0x8] sm:$0xff]
    %v18 = vld [vmem:[%s1 + $0x10] sm:$0xff]
    %v19 = vld [vmem:[%s1 + $0x18] sm:$0xff]
    %v20 = vld [vmem:[%s1 + $0x20] sm:$0xff]
    %v21 = vld [vmem:[%s1 + $0x28] sm:$0xff]
    %v22 = vld [vmem:[%s1 + $0x30] sm:$0xff]
    %v23 = vld [vmem:[%s1 + $0x38] sm:$0xff]
    %v24 = vld [vmem:[%s1 + $0x40] sm:$0xff]
    %v25 = vld [vmem:[%s1 + $0x48] sm:$0xff]
    %v26 = vld [vmem:[%s1 + $0x50] sm:$0xff]
    %v27 = vld [vmem:[%s1 + $0x58] sm:$0xff]
    %v28 = vld [vmem:[%s1 + $0x60] sm:$0xff]
    %v29 = vld [vmem:[%s1 + $0x68] sm:$0xff]
    %v30 = vld [vmem:[%s1 + $0x70] sm:$0xff]
    %v31 = vld [vmem:[%s1 + $0x78] sm:$0xff]
    %v32 = vld [vmem:[%s2] sm:$0xff]
    %v33 = vld [vmem:[%s2 + $0x8] sm:$0xff]
    %v34 = vld [vmem:[%s2 + $0x10] sm:$0xff]
    %v35 = vld [vmem:[%s2 + $0x18] sm:$0xff]
    %v36 = vld [vmem:[%s2 + $0x20] sm:$0xff]
    %v37 = vld [vmem:[%s2 + $0x28] sm:$0xff]
    %v38 = vld [vmem:[%s2 + $0x30] sm:$0xff]
    %v39 = vld [vmem:[%s2 + $0x38] sm:$0xff]
    %v40 = vld [vmem:[%s2 + $0x40] sm:$0xff]
    %v41 = vld [vmem:[%s2 + $0x48] sm:$0xff]
    %v42 = vld [vmem:[%s2 + $0x50] sm:$0xff]
    %v43 = vld [vmem:[%s2 + $0x58] sm:$0xff]
    %v44 = vld [vmem:[%s2 + $0x60] sm:$0xff]
    %v45 = vld [vmem:[%s2 + $0x68] sm:$0xff]
    %v46 = vld [vmem:[%s2 + $0x70] sm:$0xff]
    %v47 = vld [vmem:[%s2 + $0x78] sm:$0xff]
    %49 = vset.pattern.permute.xlu0 0
    %50 = vperm.xlu0 %49, %v32
    %v51 = vpop.permute.xlu0 %50
    %54 = vset.pattern.permute.xlu0 0
    %55 = vperm.xlu0 %54, %v33
    %v56 = vpop.permute.xlu0 %55
    %59 = vset.pattern.permute.xlu0 0
    %60 = vperm.xlu0 %59, %v34
    %v61 = vpop.permute.xlu0 %60
    %64 = vset.pattern.permute.xlu0 0
    %65 = vperm.xlu0 %64, %v35
    %v66 = vpop.permute.xlu0 %65
    %69 = vset.pattern.permute.xlu0 0
    %70 = vperm.xlu0 %69, %v36
    %v71 = vpop.permute.xlu0 %70
    %74 = vset.pattern.permute.xlu0 0
    %75 = vperm.xlu0 %74, %v37
    %v76 = vpop.permute.xlu0 %75
    %79 = vset.pattern.permute.xlu0 0
    %80 = vperm.xlu0 %79, %v38
    %v81 = vpop.permute.xlu0 %80
    %84 = vset.pattern.permute.xlu0 0
    %85 = vperm.xlu0 %84, %v39
    %v86 = vpop.permute.xlu0 %85
    %89 = vset.pattern.permute.xlu0 0
    %90 = vperm.xlu0 %89, %v40
    %v91 = vpop.permute.xlu0 %90
    %94 = vset.pattern.permute.xlu0 0
    %95 = vperm.xlu0 %94, %v41
    %v96 = vpop.permute.xlu0 %95
    %99 = vset.pattern.permute.xlu0 0
    %100 = vperm.xlu0 %99, %v42
    %v101 = vpop.permute.xlu0 %100
    %104 = vset.pattern.permute.xlu0 0
    %105 = vperm.xlu0 %104, %v43
    %v106 = vpop.permute.xlu0 %105
    %109 = vset.pattern.permute.xlu0 0
    %110 = vperm.xlu0 %109, %v44
    %v111 = vpop.permute.xlu0 %110
    %114 = vset.pattern.permute.xlu0 0
    %115 = vperm.xlu0 %114, %v45
    %v116 = vpop.permute.xlu0 %115
    %119 = vset.pattern.permute.xlu0 0
    %120 = vperm.xlu0 %119, %v46
    %v121 = vpop.permute.xlu0 %120
    %124 = vset.pattern.permute.xlu0 0
    %125 = vperm.xlu0 %124, %v47
    %v126 = vpop.permute.xlu0 %125
    %vm128 = vcmask 261120
    %v130 = vsel %vm128, %v16, 0
    %v133 = vsel %vm128, %v17, 0
    %v136 = vsel %vm128, %v18, 0
    %v139 = vsel %vm128, %v19, 0
    %v142 = vsel %vm128, %v20, 0
    %v145 = vsel %vm128, %v21, 0
    %v148 = vsel %vm128, %v22, 0
    %v151 = vsel %vm128, %v23, 0
    %v154 = vsel %vm128, %v24, 0
    %v157 = vsel %vm128, %v25, 0
    %v160 = vsel %vm128, %v26, 0
    %v163 = vsel %vm128, %v27, 0
    %v166 = vsel %vm128, %v28, 0
    %v169 = vsel %vm128, %v29, 0
    %v172 = vsel %vm128, %v30, 0
    %v175 = vsel %vm128, %v31, 0
    %v178 = vsel %vm128, %v15, 0
    %180 = vmatprep.subr.mxu0 0.0
    %181 = vmatpush1.xpose.msra.mxu0 %v178
    %182 = vmatprep.subr.mxu0 0.0
    %183 = vmatpush1.xpose.msra.mxu0 0.0
    %184 = vmatprep.subr.mxu0 0.0
    %185 = vmatpush1.xpose.msra.mxu0 0.0
    %186 = vmatprep.subr.mxu0 0.0
    %187 = vmatpush1.xpose.msra.mxu0 0.0
    %188 = vmatprep.subr.mxu0 0.0
    %189 = vmatpush1.xpose.msra.mxu0 0.0
    %190 = vmatprep.subr.mxu0 0.0
    %191 = vmatpush1.xpose.msra.mxu0 0.0
    %192 = vmatprep.subr.mxu0 0.0
    %193 = vmatpush1.xpose.msra.mxu0 0.0
    %194 = vmatprep.subr.mxu0 0.0
    %195 = vmatpush1.xpose.msra.mxu0 0.0
    %196 = vmatprep.subr.mxu0 0.0
    %197 = vmatpush1.xpose.msra.mxu0 0.0
    %198 = vmatprep.subr.mxu0 0.0
    %199 = vmatpush1.xpose.msra.mxu0 0.0
    %200 = vmatprep.subr.mxu0 0.0
    %201 = vmatpush1.xpose.msra.mxu0 0.0
    %202 = vmatprep.subr.mxu0 0.0
    %203 = vmatpush1.xpose.msra.mxu0 0.0
    %204 = vmatprep.subr.mxu0 0.0
    %205 = vmatpush1.xpose.msra.mxu0 0.0
    %206 = vmatprep.subr.mxu0 0.0
    %207 = vmatpush1.xpose.msra.mxu0 0.0
    %208 = vmatprep.subr.mxu0 0.0
    %209 = vmatpush1.xpose.msra.mxu0 0.0
    %210 = vmatprep.subr.mxu0 0.0
    %211 = vmatpush1.xpose.msra.mxu0 0.0
    %212 = vmatprep.subr.mxu0 0.0
    %213 = vmatpush1.xpose.msra.mxu0 0.0
    %214 = vmatprep.subr.mxu0 0.0
    %215 = vmatpush1.xpose.msra.mxu0 0.0
    %216 = vmatprep.subr.mxu0 0.0
    %217 = vmatpush1.xpose.msra.mxu0 0.0
    %218 = vmatprep.subr.mxu0 0.0
    %219 = vmatpush1.xpose.msra.mxu0 0.0
    %220 = vmatprep.subr.mxu0 0.0
    %221 = vmatpush1.xpose.msra.mxu0 0.0
    %222 = vmatprep.subr.mxu0 0.0
    %223 = vmatpush1.xpose.msra.mxu0 0.0
    %224 = vmatprep.subr.mxu0 0.0
    %225 = vmatpush1.xpose.msra.mxu0 0.0
    %226 = vmatprep.subr.mxu0 0.0
    %227 = vmatpush1.xpose.msra.mxu0 0.0
    %228 = vmatprep.subr.mxu0 0.0
    %229 = vmatpush1.xpose.msra.mxu0 0.0
    %230 = vmatprep.subr.mxu0 0.0
    %231 = vmatpush1.xpose.msra.mxu0 0.0
    %232 = vmatprep.subr.mxu0 0.0
    %233 = vmatpush1.xpose.msra.mxu0 0.0
    %234 = vmatprep.subr.mxu0 0.0
    %235 = vmatpush1.xpose.msra.mxu0 0.0
    %236 = vmatprep.subr.mxu0 0.0
    %237 = vmatpush1.xpose.msra.mxu0 0.0
    %238 = vmatprep.subr.mxu0 0.0
    %239 = vmatpush1.xpose.msra.mxu0 0.0
    %240 = vmatprep.subr.mxu0 0.0
    %241 = vmatpush1.xpose.msra.mxu0 0.0
    %242 = vmatprep.subr.mxu0 0.0
    %243 = vmatpush1.xpose.msra.mxu0 0.0
    %244 = vmatprep.mubr.f32.mxu0 0.0
    %245 = vmatmul.mubr.f32.gmra.mrb[0].mxu0 %v130
    %v246 = vpop.f32.mrb[0].mxu0
    %v247 = vadd.f32 %v51, %v246
    %v248 = vpop.f32.mrb[0].mxu0
    %249 = vmatprep.mubr.f32.mxu0 0.0
    %250 = vmatmul.mubr.f32.gmra.mrb[0].mxu0 %v133
    %v251 = vpop.f32.mrb[0].mxu0
    %v252 = vadd.f32 %v56, %v251
    %v253 = vpop.f32.mrb[0].mxu0
    %254 = vmatprep.mubr.f32.mxu0 0.0
    %255 = vmatmul.mubr.f32.gmra.mrb[0].mxu0 %v136
    %v256 = vpop.f32.mrb[0].mxu0
    %v257 = vadd.f32 %v61, %v256
    %v258 = vpop.f32.mrb[0].mxu0
    %259 = vmatprep.mubr.f32.mxu0 0.0
    %260 = vmatmul.mubr.f32.gmra.mrb[0].mxu0 %v139
    %v261 = vpop.f32.mrb[0].mxu0
    %v262 = vadd.f32 %v66, %v261
    %v263 = vpop.f32.mrb[0].mxu0
    %264 = vmatprep.mubr.f32.mxu0 0.0
    %265 = vmatmul.mubr.f32.gmra.mrb[0].mxu0 %v142
    %v266 = vpop.f32.mrb[0].mxu0
    %v267 = vadd.f32 %v71, %v266
    %v268 = vpop.f32.mrb[0].mxu0
    %269 = vmatprep.mubr.f32.mxu0 0.0
    %270 = vmatmul.mubr.f32.gmra.mrb[0].mxu0 %v145
    %v271 = vpop.f32.mrb[0].mxu0
    %v272 = vadd.f32 %v76, %v271
    %v273 = vpop.f32.mrb[0].mxu0
    %274 = vmatprep.mubr.f32.mxu0 0.0
    %275 = vmatmul.mubr.f32.gmra.mrb[0].mxu0 %v148
    %v276 = vpop.f32.mrb[0].mxu0
    %v277 = vadd.f32 %v81, %v276
    %v278 = vpop.f32.mrb[0].mxu0
    %279 = vmatprep.mubr.f32.mxu0 0.0
    %280 = vmatmul.mubr.f32.gmra.mrb[0].mxu0 %v151
    %v281 = vpop.f32.mrb[0].mxu0
    %v282 = vadd.f32 %v86, %v281
    %v283 = vpop.f32.mrb[0].mxu0
    %284 = vmatprep.mubr.f32.mxu0 0.0
    %285 = vmatmul.mubr.f32.gmra.mrb[0].mxu0 %v154
    %v286 = vpop.f32.mrb[0].mxu0
    %v287 = vadd.f32 %v91, %v286
    %v288 = vpop.f32.mrb[0].mxu0
    %289 = vmatprep.mubr.f32.mxu0 0.0
    %290 = vmatmul.mubr.f32.gmra.mrb[0].mxu0 %v157
    %v291 = vpop.f32.mrb[0].mxu0
    %v292 = vadd.f32 %v96, %v291
    %v293 = vpop.f32.mrb[0].mxu0
    %294 = vmatprep.mubr.f32.mxu0 0.0
    %295 = vmatmul.mubr.f32.gmra.mrb[0].mxu0 %v160
    %v296 = vpop.f32.mrb[0].mxu0
    %v297 = vadd.f32 %v101, %v296
    %v298 = vpop.f32.mrb[0].mxu0
    %299 = vmatprep.mubr.f32.mxu0 0.0
    %300 = vmatmul.mubr.f32.gmra.mrb[0].mxu0 %v163
    %v301 = vpop.f32.mrb[0].mxu0
    %v302 = vadd.f32 %v106, %v301
    %v303 = vpop.f32.mrb[0].mxu0
    %304 = vmatprep.mubr.f32.mxu0 0.0
    %305 = vmatmul.mubr.f32.gmra.mrb[0].mxu0 %v166
    %v306 = vpop.f32.mrb[0].mxu0
    %v307 = vadd.f32 %v111, %v306
    %v308 = vpop.f32.mrb[0].mxu0
    %309 = vmatprep.mubr.f32.mxu0 0.0
    %310 = vmatmul.mubr.f32.gmra.mrb[0].mxu0 %v169
    %v311 = vpop.f32.mrb[0].mxu0
    %v312 = vadd.f32 %v116, %v311
    %v313 = vpop.f32.mrb[0].mxu0
    %314 = vmatprep.mubr.f32.mxu0 0.0
    %315 = vmatmul.mubr.f32.gmra.mrb[0].mxu0 %v172
    %v316 = vpop.f32.mrb[0].mxu0
    %v317 = vadd.f32 %v121, %v316
    %v318 = vpop.f32.mrb[0].mxu0
    %319 = vmatprep.mubr.f32.mxu0 0.0
    %320 = vmatmul.mubr.f32.gmra.mrb[0].mxu0 %v175
    %v321 = vpop.f32.mrb[0].mxu0
    %v322 = vadd.f32 %v126, %v321
    %v323 = vpop.f32.mrb[0].mxu0
    %324 = vdwg.mxu0
    %v325 = vlaneseq
    %v326 = vshrl.u32 %v325, 7
    %v327 = vadd.s32 %v326, 8
    %v328 = vadd.s32 %v326, 16
    %v329 = vadd.s32 %v326, 24
    %v330 = vadd.s32 %v326, 32
    %v331 = vadd.s32 %v326, 40
    %v332 = vadd.s32 %v326, 48
    %v333 = vadd.s32 %v326, 56
    %v334 = vadd.s32 %v326, 64
    %v335 = vadd.s32 %v326, 72
    %v336 = vadd.s32 %v326, 80
    %v337 = vadd.s32 %v326, 88
    %v338 = vadd.s32 %v326, 96
    %v339 = vadd.s32 %v326, 104
    %v340 = vadd.s32 %v326, 112
    %v341 = vadd.s32 %v326, 120
    %vm342 = vcmp.lt.s32.totalorder %v326, 4
    %vm343 = vcmp.lt.s32.totalorder %v327, 4
    %vm344 = vcmp.lt.s32.totalorder %v328, 4
    %vm345 = vcmp.lt.s32.totalorder %v329, 4
    %vm346 = vcmp.lt.s32.totalorder %v330, 4
    %vm347 = vcmp.lt.s32.totalorder %v331, 4
    %vm348 = vcmp.lt.s32.totalorder %v332, 4
    %vm349 = vcmp.lt.s32.totalorder %v333, 4
    %vm350 = vcmp.lt.s32.totalorder %v334, 4
    %vm351 = vcmp.lt.s32.totalorder %v335, 4
    %vm352 = vcmp.lt.s32.totalorder %v336, 4
    %vm353 = vcmp.lt.s32.totalorder %v337, 4
    %vm354 = vcmp.lt.s32.totalorder %v338, 4
    %vm355 = vcmp.lt.s32.totalorder %v339, 4
    %vm356 = vcmp.lt.s32.totalorder %v340, 4
    %vm357 = vcmp.lt.s32.totalorder %v341, 4
    %v358 = vsel %vm342, %v247, -1e+30
    %v359 = vsel %vm343, %v252, -1e+30
    %v360 = vsel %vm344, %v257, -1e+30
    %v361 = vsel %vm345, %v262, -1e+30
    %v362 = vsel %vm346, %v267, -1e+30
    %v363 = vsel %vm347, %v272, -1e+30
    %v364 = vsel %vm348, %v277, -1e+30
    %v365 = vsel %vm349, %v282, -1e+30
    %v366 = vsel %vm350, %v287, -1e+30
    %v367 = vsel %vm351, %v292, -1e+30
    %v368 = vsel %vm352, %v297, -1e+30
    %v369 = vsel %vm353, %v302, -1e+30
    %v370 = vsel %vm354, %v307, -1e+30
    %v371 = vsel %vm355, %v312, -1e+30
    %v372 = vsel %vm356, %v317, -1e+30
    %v373 = vsel %vm357, %v322, -1e+30
    %vm374 = vcmask 64512
    %v375 = vsel %vm374, %v358, -inf
    %v376 = vsel %vm374, %v359, -inf
    %v377 = vsel %vm374, %v360, -inf
    %v378 = vsel %vm374, %v361, -inf
    %v379 = vsel %vm374, %v362, -inf
    %v380 = vmax.f32 %v375, %v379
    %v381 = vsel %vm374, %v363, -inf
    %v382 = vmax.f32 %v376, %v381
    %v383 = vsel %vm374, %v364, -inf
    %v384 = vmax.f32 %v377, %v383
    %v385 = vsel %vm374, %v365, -inf
    %v386 = vmax.f32 %v378, %v385
    %v387 = vsel %vm374, %v366, -inf
    %v388 = vmax.f32 %v380, %v387
    %v389 = vsel %vm374, %v367, -inf
    %v390 = vmax.f32 %v382, %v389
    %v391 = vsel %vm374, %v368, -inf
    %v392 = vmax.f32 %v384, %v391
    %v393 = vsel %vm374, %v369, -inf
    %v394 = vmax.f32 %v386, %v393
    %v395 = vsel %vm374, %v370, -inf
    %v396 = vmax.f32 %v388, %v395
    %v397 = vsel %vm374, %v371, -inf
    %v398 = vmax.f32 %v390, %v397
    %v399 = vsel %vm374, %v372, -inf
    %v400 = vmax.f32 %v392, %v399
    %v401 = vsel %vm374, %v373, -inf
    %v402 = vmax.f32 %v394, %v401
    %v403 = vmax.f32 %v396, %v398
    %v404 = vmax.f32 %v400, %v402
    %v405 = vmax.f32 %v403, %v404
    %v406 = vrot.slane %v405, 4
    %v407 = vmax.f32 %v405, %v406
    %v408 = vrot.slane %v407, 2
    %v409 = vmax.f32 %v407, %v408
    %v410 = vrot.slane %v409, 1
    %v411 = vmax.f32 %v409, %v410
    %v412 = vsub.f32 %v358, %v411
    %v413 = vsub.f32 %v359, %v411
    %v414 = vsub.f32 %v360, %v411
    %v415 = vsub.f32 %v361, %v411
    %v416 = vsub.f32 %v362, %v411
    %v417 = vsub.f32 %v363, %v411
    %v418 = vsub.f32 %v364, %v411
    %v419 = vsub.f32 %v365, %v411
    %v420 = vsub.f32 %v366, %v411
    %v421 = vsub.f32 %v367, %v411
    %v422 = vsub.f32 %v368, %v411
    %v423 = vsub.f32 %v369, %v411
    %v424 = vsub.f32 %v370, %v411
    %v425 = vsub.f32 %v371, %v411
    %v426 = vsub.f32 %v372, %v411
    %v427 = vsub.f32 %v373, %v411
    %v428 = vmul.f32 %v412, 1.442695
    %v429 = vpow.pop %v428
    %v430 = vmul.f32 %v413, 1.442695
    %v431 = vpow.pop %v430
    %v432 = vmul.f32 %v414, 1.442695
    %v433 = vpow.pop %v432
    %v434 = vmul.f32 %v415, 1.442695
    %v435 = vpow.pop %v434
    %v436 = vmul.f32 %v416, 1.442695
    %v437 = vpow.pop %v436
    %v438 = vmul.f32 %v417, 1.442695
    %v439 = vpow.pop %v438
    %v440 = vmul.f32 %v418, 1.442695
    %v441 = vpow.pop %v440
    %v442 = vmul.f32 %v419, 1.442695
    %v443 = vpow.pop %v442
    %v444 = vmul.f32 %v420, 1.442695
    %v445 = vpow.pop %v444
    %v446 = vmul.f32 %v421, 1.442695
    %v447 = vpow.pop %v446
    %v448 = vmul.f32 %v422, 1.442695
    %v449 = vpow.pop %v448
    %v450 = vmul.f32 %v423, 1.442695
    %v451 = vpow.pop %v450
    %v452 = vmul.f32 %v424, 1.442695
    %v453 = vpow.pop %v452
    %v454 = vmul.f32 %v425, 1.442695
    %v455 = vpow.pop %v454
    %v456 = vmul.f32 %v426, 1.442695
    %v457 = vpow.pop %v456
    %v458 = vmul.f32 %v427, 1.442695
    %v459 = vpow.pop %v458
    %v460 = vsel %vm374, %v429, 0.0
    %v461 = vsel %vm374, %v431, 0.0
    %v462 = vadd.f32 %v460, %v461
    %v463 = vsel %vm374, %v433, 0.0
    %v464 = vadd.f32 %v462, %v463
    %v465 = vsel %vm374, %v435, 0.0
    %v466 = vadd.f32 %v464, %v465
    %v467 = vsel %vm374, %v437, 0.0
    %v468 = vadd.f32 %v466, %v467
    %v469 = vsel %vm374, %v439, 0.0
    %v470 = vadd.f32 %v468, %v469
    %v471 = vsel %vm374, %v441, 0.0
    %v472 = vadd.f32 %v470, %v471
    %v473 = vsel %vm374, %v443, 0.0
    %v474 = vadd.f32 %v472, %v473
    %v475 = vsel %vm374, %v445, 0.0
    %v476 = vadd.f32 %v474, %v475
    %v477 = vsel %vm374, %v447, 0.0
    %v478 = vadd.f32 %v476, %v477
    %v479 = vsel %vm374, %v449, 0.0
    %v480 = vadd.f32 %v478, %v479
    %v481 = vsel %vm374, %v451, 0.0
    %v482 = vadd.f32 %v480, %v481
    %v483 = vsel %vm374, %v453, 0.0
    %v484 = vadd.f32 %v482, %v483
    %v485 = vsel %vm374, %v455, 0.0
    %v486 = vadd.f32 %v484, %v485
    %v487 = vsel %vm374, %v457, 0.0
    %v488 = vadd.f32 %v486, %v487
    %v489 = vsel %vm374, %v459, 0.0
    %v490 = vadd.f32 %v488, %v489
    %v491 = vrot.slane %v490, 4
    %v492 = vadd.f32 %v490, %v491
    %v493 = vrot.slane %v492, 2
    %v494 = vadd.f32 %v492, %v493
    %v495 = vrot.slane %v494, 1
    %v496 = vadd.f32 %v494, %v495
    %v497 = vlog2.pop %v496
    %v498 = vmul.f32 %v497, 0.6931472
    %v499 = vcvt.s32.f32 %v326
    %v500 = vcvt.s32.f32 %v327
    %v501 = vcvt.s32.f32 %v328
    %v502 = vcvt.s32.f32 %v329
    %v503 = vcvt.s32.f32 %v330
    %v504 = vcvt.s32.f32 %v331
    %v505 = vcvt.s32.f32 %v332
    %v506 = vcvt.s32.f32 %v333
    %v507 = vcvt.s32.f32 %v334
    %v508 = vcvt.s32.f32 %v335
    %v509 = vcvt.s32.f32 %v336
    %v510 = vcvt.s32.f32 %v337
    %v511 = vcvt.s32.f32 %v338
    %v512 = vcvt.s32.f32 %v339
    %v513 = vcvt.s32.f32 %v340
    %v514 = vcvt.s32.f32 %v341
    %vm515 = vcmp.eq.f32.partialorder %v358, %v411
    %vm516 = vcmp.eq.f32.partialorder %v359, %v411
    %vm517 = vcmp.eq.f32.partialorder %v360, %v411
    %vm518 = vcmp.eq.f32.partialorder %v361, %v411
    %vm519 = vcmp.eq.f32.partialorder %v362, %v411
    %vm520 = vcmp.eq.f32.partialorder %v363, %v411
    %vm521 = vcmp.eq.f32.partialorder %v364, %v411
    %vm522 = vcmp.eq.f32.partialorder %v365, %v411
    %vm523 = vcmp.eq.f32.partialorder %v366, %v411
    %vm524 = vcmp.eq.f32.partialorder %v367, %v411
    %vm525 = vcmp.eq.f32.partialorder %v368, %v411
    %vm526 = vcmp.eq.f32.partialorder %v369, %v411
    %vm527 = vcmp.eq.f32.partialorder %v370, %v411
    %vm528 = vcmp.eq.f32.partialorder %v371, %v411
    %vm529 = vcmp.eq.f32.partialorder %v372, %v411
    %vm530 = vcmp.eq.f32.partialorder %v373, %v411
    %vm531 = vmand %vm515, %vm342
    %vm532 = vmand %vm516, %vm343
    %vm533 = vmand %vm517, %vm344
    %vm534 = vmand %vm518, %vm345
    %vm535 = vmand %vm519, %vm346
    %vm536 = vmand %vm520, %vm347
    %vm537 = vmand %vm521, %vm348
    %vm538 = vmand %vm522, %vm349
    %vm539 = vmand %vm523, %vm350
    %vm540 = vmand %vm524, %vm351
    %vm541 = vmand %vm525, %vm352
    %vm542 = vmand %vm526, %vm353
    %vm543 = vmand %vm527, %vm354
    %vm544 = vmand %vm528, %vm355
    %vm545 = vmand %vm529, %vm356
    %vm546 = vmand %vm530, %vm357
    %v547 = vsel %vm531, %v499, 128.0
    %v548 = vsel %vm532, %v500, 128.0
    %v549 = vsel %vm533, %v501, 128.0
    %v550 = vsel %vm534, %v502, 128.0
    %v551 = vsel %vm535, %v503, 128.0
    %v552 = vsel %vm536, %v504, 128.0
    %v553 = vsel %vm537, %v505, 128.0
    %v554 = vsel %vm538, %v506, 128.0
    %v555 = vsel %vm539, %v507, 128.0
    %v556 = vsel %vm540, %v508, 128.0
    %v557 = vsel %vm541, %v509, 128.0
    %v558 = vsel %vm542, %v510, 128.0
    %v559 = vsel %vm543, %v511, 128.0
    %v560 = vsel %vm544, %v512, 128.0
    %v561 = vsel %vm545, %v513, 128.0
    %v562 = vsel %vm546, %v514, 128.0
    %v563 = vsel %vm374, %v547, inf
    %v564 = vsel %vm374, %v548, inf
    %v565 = vsel %vm374, %v549, inf
    %v566 = vsel %vm374, %v550, inf
    %v567 = vsel %vm374, %v551, inf
    %v568 = vmin.f32 %v563, %v567
    %v569 = vsel %vm374, %v552, inf
    %v570 = vmin.f32 %v564, %v569
    %v571 = vsel %vm374, %v553, inf
    %v572 = vmin.f32 %v565, %v571
    %v573 = vsel %vm374, %v554, inf
    %v574 = vmin.f32 %v566, %v573
    %v575 = vsel %vm374, %v555, inf
    %v576 = vmin.f32 %v568, %v575
    %v577 = vsel %vm374, %v556, inf
    %v578 = vmin.f32 %v570, %v577
    %v579 = vsel %vm374, %v557, inf
    %v580 = vmin.f32 %v572, %v579
    %v581 = vsel %vm374, %v558, inf
    %v582 = vmin.f32 %v574, %v581
    %v583 = vsel %vm374, %v559, inf
    %v584 = vmin.f32 %v576, %v583
    %v585 = vsel %vm374, %v560, inf
    %v586 = vmin.f32 %v578, %v585
    %v587 = vsel %vm374, %v561, inf
    %v588 = vmin.f32 %v580, %v587
    %v589 = vsel %vm374, %v562, inf
    %v590 = vmin.f32 %v582, %v589
    %v591 = vmin.f32 %v584, %v586
    %v592 = vmin.f32 %v588, %v590
    %v593 = vmin.f32 %v591, %v592
    %v594 = vrot.slane %v593, 4
    %v595 = vmin.f32 %v593, %v594
    %v596 = vrot.slane %v595, 2
    %v597 = vmin.f32 %v595, %v596
    %v598 = vrot.slane %v597, 1
    %v599 = vmin.f32 %v597, %v598
    %v600 = vsub.f32 0.0, %v498
    %vm601 = vcmp.eq.s32.totalorder %v326, 4
    %vm602 = vcmp.eq.s32.totalorder %v327, 4
    %vm603 = vcmp.eq.s32.totalorder %v328, 4
    %vm604 = vcmp.eq.s32.totalorder %v329, 4
    %vm605 = vcmp.eq.s32.totalorder %v330, 4
    %vm606 = vcmp.eq.s32.totalorder %v331, 4
    %vm607 = vcmp.eq.s32.totalorder %v332, 4
    %vm608 = vcmp.eq.s32.totalorder %v333, 4
    %vm609 = vcmp.eq.s32.totalorder %v334, 4
    %vm610 = vcmp.eq.s32.totalorder %v335, 4
    %vm611 = vcmp.eq.s32.totalorder %v336, 4
    %vm612 = vcmp.eq.s32.totalorder %v337, 4
    %vm613 = vcmp.eq.s32.totalorder %v338, 4
    %vm614 = vcmp.eq.s32.totalorder %v339, 4
    %vm615 = vcmp.eq.s32.totalorder %v340, 4
    %vm616 = vcmp.eq.s32.totalorder %v341, 4
    %v617 = vsel %vm601, %v247, 0.0
    %v618 = vsel %vm602, %v252, 0.0
    %v619 = vsel %vm603, %v257, 0.0
    %v620 = vsel %vm604, %v262, 0.0
    %v621 = vsel %vm605, %v267, 0.0
    %v622 = vsel %vm606, %v272, 0.0
    %v623 = vsel %vm607, %v277, 0.0
    %v624 = vsel %vm608, %v282, 0.0
    %v625 = vsel %vm609, %v287, 0.0
    %v626 = vsel %vm610, %v292, 0.0
    %v627 = vsel %vm611, %v297, 0.0
    %v628 = vsel %vm612, %v302, 0.0
    %v629 = vsel %vm613, %v307, 0.0
    %v630 = vsel %vm614, %v312, 0.0
    %v631 = vsel %vm615, %v317, 0.0
    %v632 = vsel %vm616, %v322, 0.0
    %v633 = vsel %vm374, %v617, 0.0
    %v634 = vsel %vm374, %v618, 0.0
    %v635 = vadd.f32 %v633, %v634
    %v636 = vsel %vm374, %v619, 0.0
    %v637 = vadd.f32 %v635, %v636
    %v638 = vsel %vm374, %v620, 0.0
    %v639 = vadd.f32 %v637, %v638
    %v640 = vsel %vm374, %v621, 0.0
    %v641 = vadd.f32 %v639, %v640
    %v642 = vsel %vm374, %v622, 0.0
    %v643 = vadd.f32 %v641, %v642
    %v644 = vsel %vm374, %v623, 0.0
    %v645 = vadd.f32 %v643, %v644
    %v646 = vsel %vm374, %v624, 0.0
    %v647 = vadd.f32 %v645, %v646
    %v648 = vsel %vm374, %v625, 0.0
    %v649 = vadd.f32 %v647, %v648
    %v650 = vsel %vm374, %v626, 0.0
    %v651 = vadd.f32 %v649, %v650
    %v652 = vsel %vm374, %v627, 0.0
    %v653 = vadd.f32 %v651, %v652
    %v654 = vsel %vm374, %v628, 0.0
    %v655 = vadd.f32 %v653, %v654
    %v656 = vsel %vm374, %v629, 0.0
    %v657 = vadd.f32 %v655, %v656
    %v658 = vsel %vm374, %v630, 0.0
    %v659 = vadd.f32 %v657, %v658
    %v660 = vsel %vm374, %v631, 0.0
    %v661 = vadd.f32 %v659, %v660
    %v662 = vsel %vm374, %v632, 0.0
    %v663 = vadd.f32 %v661, %v662
    %v664 = vrot.slane %v663, 4
    %v665 = vadd.f32 %v663, %v664
    %v666 = vrot.slane %v665, 2
    %v667 = vadd.f32 %v665, %v666
    %v668 = vrot.slane %v667, 1
    %v669 = vadd.f32 %v667, %v668
    %vm670 = vcmp.eq.s32.totalorder %v326, 0
    %vm671 = vcmp.eq.s32.totalorder %v326, 1
    %vm672 = vcmp.eq.s32.totalorder %v326, 2
    %v673 = vsel %vm672, %v599, 0.0
    %v674 = vsel %vm671, %v600, %v673
    %v675 = vsel %vm670, %v669, %v674
    %676 = vst.msk [vmem:[#allocation2] sm:$0xff] %vm374, %v675
    // Predicated region
    $region14: #{tpu_custom_call.1} parent=1 // pred_check
      _
    $region15: #{tpu_custom_call.1} parent=1 // pred_check_branch
      %678 = sbr.rel (0) target = $region17
    $region16: #{tpu_custom_call.1} parent=1 // pred_region
      %s680 = ssub.s32 128, 128
      %681 = vsyncadd [#allocation3], %s680
      %s683 = sshll.u32 [#allocation2], 4
      %s684 = int_to_ptr.vmem [resolvable:$true] %s683
      %686 = dma.vmem_to_hbm [thread:$0]  %s684, 128, %s3, [#allocation3]
    $region17: #{tpu_custom_call.1} parent=1 // pred_fallthru
      _
    // Predicated region
    $region18: #{tpu_custom_call.1} parent=1 // pred_check
      _
    $region19: #{tpu_custom_call.1} parent=1 // pred_check_branch
      %688 = sbr.rel (0) target = $region21
    $region20: #{tpu_custom_call.1} parent=1 // pred_region
      %689 = dma.done [#allocation3], 128
    $region21: #{tpu_custom_call.1} parent=1 // pred_fallthru
      _
    %690 = vsyncpa [#allocation3], 1

</llo_original>
